<compile_context>
chip_gen: v7x
topology: tpu7x:2x2x1
jax: 0.10.0
libtpu: 0.0.40
codegen_flags: <defaults>
</compile_context>

<pallas_src>
import functools

import jax
import jax.numpy as jnp
from jax import lax
from jax.experimental import pallas as pl
from jax.experimental.pallas import tpu as pltpu

_LANES = 128
_SUBLANES = 8
_MAX_BLOCK_ROWS = 2048  # (2048, 128) f32 block = 1 MiB per pipeline buffer


def _pow_modulator(base, gamma):
    """(1 - p_t) ** gamma; explicit multiplies for small integer gamma."""
    g = float(gamma)
    gi = int(g)
    if g == gi and 0 <= gi <= 8:
        if gi == 0:
            return jnp.ones_like(base)
        out = base
        for _ in range(gi - 1):
            out = out * base
        return out
    return base ** g


def _focal_elems(x, t, alpha, gamma):
    # BCEWithLogits (reduction='none'), numerically-stable form:
    #   bce = max(x, 0) - x*t + log1p(exp(-|x|))
    bce = jnp.maximum(x, 0.0) - x * t + jnp.log1p(jnp.exp(-jnp.abs(x)))
    p_t = jnp.exp(-bce)
    mod = _pow_modulator(jnp.maximum(1.0 - p_t, 0.0), gamma)
    return alpha * mod * bce


def _focal_reduce_kernel(x_ref, t_ref, out_ref, acc_ref, *,
                         alpha, gamma, n_valid, block_elems,
                         blocks_per_split, mask_tail):
    c = pl.program_id(0)          # split (parallel across TCs on v7x)
    j = pl.program_id(1)          # reduction step within the split

    @pl.when(j == 0)
    def _():
        acc_ref[...] = jnp.zeros_like(acc_ref)

    x = x_ref[...].astype(jnp.float32)
    t = t_ref[...].astype(jnp.float32)
    fl = _focal_elems(x, t, alpha, gamma)

    if mask_tail:
        # Zero contributions of zero-padded elements (pure VPU, no HBM mask).
        base = (c * blocks_per_split + j) * block_elems
        row = lax.broadcasted_iota(jnp.int32, fl.shape, 0)
        lane = lax.broadcasted_iota(jnp.int32, fl.shape, 1)
        idx = base + row * _LANES + lane
        fl = jnp.where(idx < n_valid, fl, 0.0)

    # Per-lane VPU accumulate; no per-step cross-lane reduce, no scalar chain.
    acc_ref[...] += fl

    @pl.when(j == pl.num_programs(1) - 1)
    def _():
        # Reduce over rows once; broadcast over the 8 output sublanes.
        colsum = jnp.sum(acc_ref[...], axis=0, keepdims=True)        # (1, 128)
        out_ref[...] = jnp.broadcast_to(
            colsum.reshape(1, 1, _LANES), out_ref.shape)             # (1, 8, 128)


def _focal_none_kernel(x_ref, t_ref, out_ref, *, alpha, gamma):
    x = x_ref[...].astype(jnp.float32)
    t = t_ref[...].astype(jnp.float32)
    out_ref[...] = _focal_elems(x, t, alpha, gamma).astype(out_ref.dtype)


def _layout(n):
    rows_needed = pl.cdiv(n, _LANES)
    block_rows = min(_MAX_BLOCK_ROWS,
                     pl.cdiv(rows_needed, _SUBLANES) * _SUBLANES)
    num_blocks = pl.cdiv(rows_needed, block_rows)
    # Split the reduction across (up to) two TensorCores (v7x megacore);
    # on single-TC chips the extra axis just iterates sequentially.
    num_splits = 2 if num_blocks >= 2 else 1
    blocks_per_split = pl.cdiv(num_blocks, num_splits)
    num_blocks = blocks_per_split * num_splits
    rows = num_blocks * block_rows
    return rows, block_rows, num_splits, blocks_per_split


def _as_slab(arr, rows):
    """Flatten to (rows, 128), zero-padding only when needed; keep dtype."""
    flat = arr.reshape(-1)
    pad = rows * _LANES - flat.shape[0]
    if pad > 0:
        flat = jnp.pad(flat, (0, pad))
    return flat.reshape(rows, _LANES)


def focal_loss(inputs, targets, alpha=0.25, gamma=2.0, reduction="mean"):
    """Pallas-TPU focal loss matching the PyTorch FocalLoss.forward()."""
    n = inputs.size
    rows, block_rows, num_splits, blocks_per_split = _layout(n)
    pad = rows * _LANES - n
    x2 = _as_slab(inputs, rows)
    t2 = _as_slab(targets, rows)

    if reduction in ("mean", "sum"):
        in_spec = pl.BlockSpec((block_rows, _LANES),
                               lambda c, j: (c * blocks_per_split + j, 0))
        kernel = functools.partial(
            _focal_reduce_kernel, alpha=float(alpha), gamma=float(gamma),
            n_valid=n, block_elems=block_rows * _LANES,
            blocks_per_split=blocks_per_split, mask_tail=pad > 0)
        partials = pl.pallas_call(
            kernel,
            out_shape=jax.ShapeDtypeStruct((num_splits, _SUBLANES, _LANES),
                                           jnp.float32),
            grid_spec=pltpu.PrefetchScalarGridSpec(
                num_scalar_prefetch=0,
                grid=(num_splits, blocks_per_split),
                in_specs=[in_spec, in_spec],
                out_specs=pl.BlockSpec((1, _SUBLANES, _LANES),
                                       lambda c, j: (c, 0, 0)),
                scratch_shapes=[pltpu.VMEM((block_rows, _LANES), jnp.float32)],
            ),
            compiler_params=pltpu.CompilerParams(
                dimension_semantics=("parallel", "arbitrary")),
        )(x2, t2)
        # All 8 sublanes of each split hold identical per-lane column sums.
        total = jnp.sum(partials[:, 0, :])
        if reduction == "mean":
            return total / jnp.float32(n)
        return total

    # reduction == 'none': elementwise focal loss, same shape/dtype as inputs.
    num_blocks = num_splits * blocks_per_split
    tile_spec = pl.BlockSpec((block_rows, _LANES), lambda i: (i, 0))
    kernel = functools.partial(_focal_none_kernel,
                               alpha=float(alpha), gamma=float(gamma))
    out2 = pl.pallas_call(
        kernel,
        out_shape=jax.ShapeDtypeStruct((rows, _LANES), inputs.dtype),
        grid_spec=pltpu.PrefetchScalarGridSpec(
            num_scalar_prefetch=0,
            grid=(num_blocks,),
            in_specs=[tile_spec, tile_spec],
            out_specs=tile_spec,
        ),
        compiler_params=pltpu.CompilerParams(
            dimension_semantics=("parallel",)),
    )(x2, t2)
    return out2.reshape(-1)[:n].reshape(inputs.shape)


def _focal_loss_ref(inputs, targets, alpha=0.25, gamma=2.0, reduction="mean"):
    x = inputs.astype(jnp.float32)
    t = targets.astype(jnp.float32)
    bce = jnp.maximum(x, 0.0) - x * t + jnp.log1p(jnp.exp(-jnp.abs(x)))
    p_t = jnp.exp(-bce)
    fl = alpha * (1.0 - p_t) ** gamma * bce
    if reduction == "mean":
        return fl.mean()
    if reduction == "sum":
        return fl.sum()
    return fl


if __name__ == "__main__":
    key = jax.random.PRNGKey(0)
    k1, k2, k3, k4, k5, k6 = jax.random.split(key, 6)

    # Small NCHW case (as the PyTorch module would see it).
    x = jax.random.normal(k1, (2, 4, 16, 16), dtype=jnp.float32)
    t = (jax.random.uniform(k2, (2, 4, 16, 16)) > 0.5).astype(jnp.float32)

    out_mean = jax.block_until_ready(focal_loss(x, t, reduction="mean"))
    out_sum = jax.block_until_ready(focal_loss(x, t, reduction="sum"))
    out_none = jax.block_until_ready(focal_loss(x, t, reduction="none"))

    assert jnp.allclose(out_mean, _focal_loss_ref(x, t, reduction="mean"),
                        rtol=1e-5, atol=1e-6)
    assert jnp.allclose(out_sum, _focal_loss_ref(x, t, reduction="sum"),
                        rtol=1e-5, atol=1e-5)
    assert jnp.allclose(out_none, _focal_loss_ref(x, t, reduction="none"),
                        rtol=1e-5, atol=1e-6)
    assert out_none.shape == x.shape

    # Ragged case: exercises the in-kernel tail mask (n not a multiple of 128).
    xr = jax.random.normal(k3, (3, 5, 7), dtype=jnp.float32)
    tr = (jax.random.uniform(k4, (3, 5, 7)) > 0.5).astype(jnp.float32)
    out_r = jax.block_until_ready(focal_loss(xr, tr, reduction="mean"))
    assert jnp.allclose(out_r, _focal_loss_ref(xr, tr, reduction="mean"),
                        rtol=1e-5, atol=1e-6)
    out_rn = jax.block_until_ready(focal_loss(xr, tr, reduction="none"))
    assert jnp.allclose(out_rn, _focal_loss_ref(xr, tr, reduction="none"),
                        rtol=1e-5, atol=1e-6)

    # Larger case: exercises multi-block grid + 2-way split of the reduction.
    xl = jax.random.normal(k5, (2, 5, 256, 128), dtype=jnp.float32)
    tl = (jax.random.uniform(k6, (2, 5, 256, 128)) > 0.5).astype(jnp.float32)
    out_l = jax.block_until_ready(focal_loss(xl, tl, reduction="mean"))
    assert jnp.allclose(out_l, _focal_loss_ref(xl, tl, reduction="mean"),
                        rtol=1e-5, atol=1e-6)

    print("KERNEL_OK")
</pallas_src>

<mosaic_0001>
module attributes {stable_mosaic.version = 11 : i64} {
  func.func @_focal_reduce_kernel(%arg0: i32, %arg1: i32, %arg2: memref<16x128xf32, #tpu.memory_space<vmem>>, %arg3: memref<16x128xf32, #tpu.memory_space<vmem>>, %arg4: memref<1x8x128xf32, #tpu.memory_space<vmem>>, %arg5: memref<16x128xf32, #tpu.memory_space<vmem>>) attributes {dimension_semantics = [#tpu.dimension_semantics<parallel>, #tpu.dimension_semantics<arbitrary>], iteration_bounds = array<i64: 1, 1>, scalar_prefetch = 0 : i64, scratch_operands = 1 : i64, tpu.core_type = #tpu.core_type<tc>, window_params = [{transform_indices = @transform_0, window_bounds = array<i64: 16, 128>}, {transform_indices = @transform_1, window_bounds = array<i64: 16, 128>}, {transform_indices = @transform_2, window_bounds = array<i64: 1, 8, 128>}]} {
    %c0_i32 = arith.constant 0 : i32
    %0 = arith.cmpi eq, %arg1, %c0_i32 : i32
    %1 = arith.extui %0 : i1 to i32
    %c0_i32_0 = arith.constant 0 : i32
    %2 = arith.cmpi ne, %1, %c0_i32_0 : i32
    scf.if %2 {
      %cst_15 = arith.constant 0.000000e+00 : f32
      %32 = vector.broadcast %cst_15 : f32 to vector<16x128xf32>
      %c0_16 = arith.constant 0 : index
      %c0_17 = arith.constant 0 : index
      %33 = vector.load %arg5[%c0_16, %c0_17] : memref<16x128xf32, #tpu.memory_space<vmem>>, vector<16x128xf32>
      tpu.vector_store %arg5[%c0_16, %c0_17], %32 {strides = array<i32>} : memref<16x128xf32, #tpu.memory_space<vmem>>, vector<16x128xf32>,
    } else {
    }
    %c0 = arith.constant 0 : index
    %c0_1 = arith.constant 0 : index
    %3 = vector.load %arg2[%c0, %c0_1] : memref<16x128xf32, #tpu.memory_space<vmem>>, vector<16x128xf32>
    %c0_2 = arith.constant 0 : index
    %c0_3 = arith.constant 0 : index
    %4 = vector.load %arg3[%c0_2, %c0_3] : memref<16x128xf32, #tpu.memory_space<vmem>>, vector<16x128xf32>
    %cst = arith.constant 0.000000e+00 : f32
    %5 = vector.broadcast %cst : f32 to vector<16x128xf32>
    %6 = arith.maximumf %3, %5 : vector<16x128xf32>
    %7 = arith.mulf %3, %4 : vector<16x128xf32>
    %8 = arith.subf %6, %7 : vector<16x128xf32>
    %9 = math.absf %3 : vector<16x128xf32>
    %cst_4 = arith.constant 0.000000e+00 : f32
    %10 = vector.broadcast %cst_4 : f32 to vector<16x128xf32>
    %11 = arith.subf %10, %9 : vector<16x128xf32>
    %12 = math.exp %11 : vector<16x128xf32>
    %13 = math.log1p %12 : vector<16x128xf32>
    %14 = arith.addf %8, %13 : vector<16x128xf32>
    %cst_5 = arith.constant 0.000000e+00 : f32
    %15 = vector.broadcast %cst_5 : f32 to vector<16x128xf32>
    %16 = arith.subf %15, %14 : vector<16x128xf32>
    %17 = math.exp %16 : vector<16x128xf32>
    %cst_6 = arith.constant 1.000000e+00 : f32
    %18 = vector.broadcast %cst_6 : f32 to vector<16x128xf32>
    %19 = arith.subf %18, %17 : vector<16x128xf32>
    %cst_7 = arith.constant 0.000000e+00 : f32
    %20 = vector.broadcast %cst_7 : f32 to vector<16x128xf32>
    %21 = arith.maximumf %19, %20 : vector<16x128xf32>
    %22 = arith.mulf %21, %21 : vector<16x128xf32>
    %cst_8 = arith.constant 2.500000e-01 : f32
    %23 = vector.broadcast %cst_8 : f32 to vector<16x128xf32>
    %24 = arith.mulf %23, %22 : vector<16x128xf32>
    %25 = arith.mulf %24, %14 : vector<16x128xf32>
    %c0_9 = arith.constant 0 : index
    %c0_10 = arith.constant 0 : index
    %26 = vector.load %arg5[%c0_9, %c0_10] : memref<16x128xf32, #tpu.memory_space<vmem>>, vector<16x128xf32>
    %27 = arith.addf %26, %25 : vector<16x128xf32>
    %c0_11 = arith.constant 0 : index
    %c0_12 = arith.constant 0 : index
    %28 = vector.load %arg5[%c0_11, %c0_12] : memref<16x128xf32, #tpu.memory_space<vmem>>, vector<16x128xf32>
    tpu.vector_store %arg5[%c0_11, %c0_12], %27 {strides = array<i32>} : memref<16x128xf32, #tpu.memory_space<vmem>>, vector<16x128xf32>,
    %c0_i32_13 = arith.constant 0 : i32
    %29 = arith.cmpi eq, %arg1, %c0_i32_13 : i32
    %30 = arith.extui %29 : i1 to i32
    %c0_i32_14 = arith.constant 0 : i32
    %31 = arith.cmpi ne, %30, %c0_i32_14 : i32
    scf.if %31 {
      %c0_15 = arith.constant 0 : index
      %c0_16 = arith.constant 0 : index
      %32 = vector.load %arg5[%c0_15, %c0_16] : memref<16x128xf32, #tpu.memory_space<vmem>>, vector<16x128xf32>
      %cst_17 = arith.constant dense<0.000000e+00> : vector<128xf32>
      %33 = vector.multi_reduction <add>, %32, %cst_17 [0] : vector<16x128xf32> to vector<128xf32>
      %34 = vector.shape_cast %33 : vector<128xf32> to vector<1x128xf32>
      %35 = vector.shape_cast %34 : vector<1x128xf32> to vector<1x1x128xf32>
      %36 = vector.shape_cast %35 : vector<1x1x128xf32> to vector<1x1x128xf32>
      %37 = vector.broadcast %36 : vector<1x1x128xf32> to vector<1x8x128xf32>
      %c0_18 = arith.constant 0 : index
      %c0_19 = arith.constant 0 : index
      %c0_20 = arith.constant 0 : index
      %38 = vector.load %arg4[%c0_18, %c0_19, %c0_20] : memref<1x8x128xf32, #tpu.memory_space<vmem>>, vector<1x8x128xf32>
      tpu.vector_store %arg4[%c0_18, %c0_19, %c0_20], %37 {strides = array<i32>} : memref<1x8x128xf32, #tpu.memory_space<vmem>>, vector<1x8x128xf32>,
    } else {
    }
    return
  }
  func.func @transform_0(%arg0: i32, %arg1: i32) -> (i32, i32) {
    %c1_i32 = arith.constant 1 : i32
    %0 = arith.muli %arg0, %c1_i32 : i32
    %1 = arith.addi %0, %arg1 : i32
    %c0_i32 = arith.constant 0 : i32
    %c0_i32_0 = arith.constant 0 : i32
    return %1, %c0_i32 : i32, i32
  }
  func.func @transform_1(%arg0: i32, %arg1: i32) -> (i32, i32) {
    %c1_i32 = arith.constant 1 : i32
    %0 = arith.muli %arg0, %c1_i32 : i32
    %1 = arith.addi %0, %arg1 : i32
    %c0_i32 = arith.constant 0 : i32
    %c0_i32_0 = arith.constant 0 : i32
    return %1, %c0_i32 : i32, i32
  }
  func.func @transform_2(%arg0: i32, %arg1: i32) -> (i32, i32, i32) {
    %c0_i32 = arith.constant 0 : i32
    %c0_i32_0 = arith.constant 0 : i32
    %c0_i32_1 = arith.constant 0 : i32
    return %arg0, %c0_i32, %c0_i32_0 : i32, i32, i32
  }
}

</mosaic_0001>

<llo_original>
// kernel: tpu_custom_call.1
$region0: #{tpu_custom_call.1}
  #allocation0 [shape = 'u32[]', space=smem, size = 0x4, offset = 0x4, fixed_abs, tag = 'smem constant byte address 0x4 - core index']
  #allocation1 [shape = 'u32[144,128]{1,0:T(1,128)}', space=vmem, size = 0x12000, scoped, tag = 'internal scratch']
  #allocation2 [shape = 'f32[16,128]{1,0:T(8,128)}', space=vmem, size = 0x2000, scoped, tag = 'scratch operand']
  %s0 = inlined_call_operand.hbm [shape: f32[16,128], index: 0, kind: input, shape index: {}]
  %s1 = inlined_call_operand.hbm [shape: f32[16,128], index: 1, kind: input, shape index: {}]
  %s2 = inlined_call_operand.hbm [shape: f32[1,8,128], index: 2, kind: output, shape index: {}]
  %s3 = sld [smem:[#allocation0]]
  $region34: #{tpu_custom_call.1} parent=0
    _
  %s5 = ssub.s32 1, %s3
  %s6 = scalar_select 0, %s5, %s3
  $region1: #{tpu_custom_call.1} parent=0
    #allocation3 [shape = 'u8[8192]{0}', space=vmem, size = 0x2000, scoped, tag = 'input window, operand 0, single buffered']
    #allocation4 [shape = 's32[1]{0}', space=sflag, size = 0x4, scoped, tag = 'scoped memory for tpu_custom_call.1']
    #allocation5 [shape = 's32[1]{0}', space=sflag, size = 0x4, scoped, tag = 'scoped memory for tpu_custom_call.1']
    #allocation6 [shape = 'u8[8192]{0}', space=vmem, size = 0x2000, scoped, tag = 'input window, operand 1, single buffered']
    #allocation7 [shape = 's32[1]{0}', space=sflag, size = 0x4, scoped, tag = 'scoped memory for tpu_custom_call.1']
    #allocation8 [shape = 'u8[4096]{0}', space=vmem, size = 0x1000, scoped, tag = 'output window, operand 0, single buffered']
    %7 = vsyncpa [#allocation4], 0
    %8 = vsyncpa [#allocation7], 0
    %9 = vsyncpa [#allocation5], 0
    // Predicated region
    $region2: #{tpu_custom_call.1} parent=1 // pred_check
      _
    $region3: #{tpu_custom_call.1} parent=1 // pred_check_branch
      %11 = sbr.rel (0) target = $region5
    $region4: #{tpu_custom_call.1} parent=1 // pred_region
      %s12 = sadd.s32 0, 0
      %s13 = smul.u32 2, %s12
      %s15 = ssub.s32 256, 256
      %16 = vsyncadd [#allocation4], %s15
      %s17 = smul.addr %s13, 128
      %s18 = scalar_lea.hbm %s0, %s17
      %s19 = sshll.u32 [#allocation3], 4
      %s20 = int_to_ptr.vmem [resolvable:$true] %s19
      %25 = dma.hbm_to_vmem [thread:$0]  %s18, 256, %s20, [#allocation4], 128, 128, 8
    $region5: #{tpu_custom_call.1} parent=1 // pred_fallthru
      _
    // Predicated region
    $region6: #{tpu_custom_call.1} parent=1 // pred_check
      _
    $region7: #{tpu_custom_call.1} parent=1 // pred_check_branch
      %27 = sbr.rel (0) target = $region9
    $region8: #{tpu_custom_call.1} parent=1 // pred_region
      %s28 = sadd.s32 0, 0
      %s29 = smul.u32 2, %s28
      %s31 = ssub.s32 256, 256
      %32 = vsyncadd [#allocation7], %s31
      %s33 = smul.addr %s29, 128
      %s34 = scalar_lea.hbm %s1, %s33
      %s35 = sshll.u32 [#allocation6], 4
      %s36 = int_to_ptr.vmem [resolvable:$true] %s35
      %41 = dma.hbm_to_vmem [thread:$0]  %s34, 256, %s36, [#allocation7], 128, 128, 8
    $region9: #{tpu_custom_call.1} parent=1 // pred_fallthru
      _
    // Predicated region
    $region10: #{tpu_custom_call.1} parent=1 // pred_check
      _
    $region11: #{tpu_custom_call.1} parent=1 // pred_check_branch
      %43 = sbr.rel (0) target = $region13
    $region12: #{tpu_custom_call.1} parent=1 // pred_region
      %44 = dma.done [#allocation4], 256
    $region13: #{tpu_custom_call.1} parent=1 // pred_fallthru
      _
    // Predicated region
    $region14: #{tpu_custom_call.1} parent=1 // pred_check
      _
    $region15: #{tpu_custom_call.1} parent=1 // pred_check_branch
      %46 = sbr.rel (0) target = $region17
    $region16: #{tpu_custom_call.1} parent=1 // pred_region
      %47 = dma.done [#allocation7], 256
    $region17: #{tpu_custom_call.1} parent=1 // pred_fallthru
      _
    %s48 = sadd.s32 0, 0
    %s49 = smul.u32 2, %s48
    %s50 = sadd.s32 0, 0
    %s51 = smul.u32 2, %s50
    %p52 = scmp.eq.s32.totalorder 0, 0
    // Predicated region
    $region18: #{tpu_custom_call.1} parent=1 // pred_check
      %p53 = pneg %p52
    $region19: #{tpu_custom_call.1} parent=1 // pred_check_branch
      %55 = sbr.rel (%p53) target = $region21
    $region20: #{tpu_custom_call.1} parent=1 // pred_region
      %56 = vst [vmem:[#allocation2] sm:$0xff] 0.0
      %57 = vst [vmem:[#allocation2 + $0x8] sm:$0xff] 0.0
    $region21: #{tpu_custom_call.1} parent=1 // pred_fallthru
      _
    %v58 = vld [vmem:[#allocation3] sm:$0xff]
    %v59 = vld [vmem:[#allocation3 + $0x8] sm:$0xff]
    %v60 = vld [vmem:[#allocation6] sm:$0xff]
    %v61 = vld [vmem:[#allocation6 + $0x8] sm:$0xff]
    %v62 = vmax.f32 %v58, 0.0
    %v63 = vmax.f32 %v59, 0.0
    %v64 = vmul.f32 %v58, %v60
    %v65 = vmul.f32 %v59, %v61
    %v66 = vsub.f32 %v62, %v64
    %v67 = vsub.f32 %v63, %v65
    %v68 = vand.u32 2147483647, %v58
    %v69 = vand.u32 2147483647, %v59
    %v70 = vsub.f32 0.0, %v68
    %v71 = vsub.f32 0.0, %v69
    %v72 = vmul.f32 %v70, 1.442695
    %v73 = vpow.pop %v72
    %v74 = vmul.f32 %v71, 1.442695
    %v75 = vpow.pop %v74
    %v76 = vadd.f32 %v73, 1.0
    %v77 = vlog2.pop %v76
    %v78 = vmul.f32 %v77, 0.6931472
    %v79 = vmul.f32 -0.5, %v73
    %v80 = vadd.f32 %v79, 1.0
    %v81 = vmul.f32 %v80, %v73
    %v82 = vand.u32 2147483647, %v73
    %vm83 = vcmp.lt.f32.partialorder %v82, 0.0004427343
    %v84 = vsel %vm83, %v81, %v78
    %v85 = vadd.f32 %v75, 1.0
    %v86 = vlog2.pop %v85
    %v87 = vmul.f32 %v86, 0.6931472
    %v88 = vmul.f32 -0.5, %v75
    %v89 = vadd.f32 %v88, 1.0
    %v90 = vmul.f32 %v89, %v75
    %v91 = vand.u32 2147483647, %v75
    %vm92 = vcmp.lt.f32.partialorder %v91, 0.0004427343
    %v93 = vsel %vm92, %v90, %v87
    %v94 = vadd.f32 %v66, %v84
    %v95 = vadd.f32 %v67, %v93
    %v96 = vsub.f32 0.0, %v94
    %v97 = vsub.f32 0.0, %v95
    %v98 = vmul.f32 %v96, 1.442695
    %v99 = vpow.pop %v98
    %v100 = vmul.f32 %v97, 1.442695
    %v101 = vpow.pop %v100
    %v102 = vsub.f32 1.0, %v99
    %v103 = vsub.f32 1.0, %v101
    %v104 = vmax.f32 %v102, 0.0
    %v105 = vmax.f32 %v103, 0.0
    %v106 = vmul.f32 %v104, %v104
    %v107 = vmul.f32 %v105, %v105
    %v108 = vmul.f32 %v106, 0.25
    %v109 = vmul.f32 %v107, 0.25
    %v110 = vmul.f32 %v108, %v94
    %v111 = vmul.f32 %v109, %v95
    %v112 = vld [vmem:[#allocation2] sm:$0xff]
    %v113 = vld [vmem:[#allocation2 + $0x8] sm:$0xff]
    %v114 = vadd.f32 %v112, %v110
    %v115 = vadd.f32 %v113, %v111
    %116 = vst [vmem:[#allocation2] sm:$0xff] %v114
    %117 = vst [vmem:[#allocation2 + $0x8] sm:$0xff] %v115
    // Predicated region
    $region22: #{tpu_custom_call.1} parent=1 // pred_check
      %p118 = pneg %p52
    $region23: #{tpu_custom_call.1} parent=1 // pred_check_branch
      %120 = sbr.rel (%p118) target = $region25
    $region24: #{tpu_custom_call.1} parent=1 // pred_region
      %v121 = vld [vmem:[#allocation2] sm:$0xff]
      %v122 = vld [vmem:[#allocation2 + $0x8] sm:$0xff]
      %v123 = vadd.f32 %v121, %v122
      %v124 = vrot.slane %v123, 4
      %v125 = vadd.f32 %v123, %v124
      %v126 = vrot.slane %v125, 2
      %v127 = vadd.f32 %v125, %v126
      %v128 = vrot.slane %v127, 1
      %v129 = vadd.f32 %v127, %v128
      %130 = vst [vmem:[#allocation8] sm:$0xff] %v129
    $region25: #{tpu_custom_call.1} parent=1 // pred_fallthru
      _
    // Predicated region
    $region26: #{tpu_custom_call.1} parent=1 // pred_check
      _
    $region27: #{tpu_custom_call.1} parent=1 // pred_check_branch
      %132 = sbr.rel (0) target = $region29
    $region28: #{tpu_custom_call.1} parent=1 // pred_region
      %s134 = ssub.s32 128, 128
      %135 = vsyncadd [#allocation5], %s134
      %s137 = sshll.u32 [#allocation8], 4
      %s138 = int_to_ptr.vmem [resolvable:$true] %s137
      %140 = dma.vmem_to_hbm [thread:$0]  %s138, 128, %s2, [#allocation5]
    $region29: #{tpu_custom_call.1} parent=1 // pred_fallthru
      _
    // Predicated region
    $region30: #{tpu_custom_call.1} parent=1 // pred_check
      _
    $region31: #{tpu_custom_call.1} parent=1 // pred_check_branch
      %142 = sbr.rel (0) target = $region33
    $region32: #{tpu_custom_call.1} parent=1 // pred_region
      %143 = dma.done [#allocation5], 128
    $region33: #{tpu_custom_call.1} parent=1 // pred_fallthru
      _
    %144 = vsyncpa [#allocation4], 1
    %145 = vsyncpa [#allocation7], 1
    %146 = vsyncpa [#allocation5], 1

</llo_original>
